<compile_context>
chip_gen: v7x
topology: tpu7x:2x2x1
jax: 0.10.0
libtpu: 0.0.40
codegen_flags: <defaults>
</compile_context>

<pallas_src>
import jax
import jax.numpy as jnp
from jax.experimental import pallas as pl
from jax.experimental.pallas import tpu as pltpu

# ---------------- configuration (small, consistent with the forward) ---------
B = 2            # batch
C_IN = 2         # in_chans=2 (as in the module)
H = W = 16       # spatial
KH = KW = 3      # conv stem kernel
N_FEATURES = 32  # backbone feature width (timm n_features surrogate)

HP, WP = H + 2, W + 2        # SAME-padded spatial (stride 1, 3x3 -> pad 1)
HWP = 384                    # per-batch flattened padded width (324 -> 384, lane aligned)
C_PAD = 8                    # channels padded 2 -> 8 (one f32 sublane tile per tap slice)
K_PAD = KH * KW * C_PAD      # 72: contraction dim of the single conv matmul
WIDE = B * HWP               # 768: lane-dense minor dim of the conv matmul
WIDE_IN = WIDE + 128         # 896: input width (slack >= max tap shift 2*WP+2 = 38)


# ---------------- Pallas kernel -----------------------------------------------
def _fused_model_kernel(xw_ref, wc_ref, bc_ref, wf_ref, mask_ref, bf_ref, out_ref):
    # xw_ref:   (C_PAD, WIDE_IN) f32  flattened SAME-padded input (zero-padded)
    # wc_ref:   (N_FEATURES, K_PAD) f32  conv weight, tap-major / channel-minor
    # bc_ref:   (N_FEATURES, 1) f32  conv bias
    # wf_ref:   (N_FEATURES, 1) f32  fc weight
    # mask_ref: (1, WIDE) f32  valid-anchor mask folded with 1/(H*W)
    # bf_ref:   (1,) f32 in SMEM  fc bias
    # out_ref:  (1, B) f32
    xw = xw_ref[...]                                     # (8, 896) f32

    # Fused im2col: 9 statically shifted views of the flattened padded image.
    # Each tap is a full 8-sublane f32 slab; lane shift s is a static offset.
    taps = []
    for i in range(KH):
        for j in range(KW):
            s = i * WP + j
            taps.append(xw[:, s:s + WIDE])               # (8, 768)
    patches = jnp.concatenate(taps, axis=0)              # (72, 768) f32

    # Conv stem as ONE lane-dense MXU matmul: (F, K) @ (K, WIDE) -> (F, WIDE).
    # bf16 operands, f32 accumulation.
    h = jnp.dot(wc_ref[...].astype(jnp.bfloat16),
                patches.astype(jnp.bfloat16),
                preferred_element_type=jnp.float32)      # (32, 768) f32
    h = jnp.maximum(h + bc_ref[...], 0.0)                # bias + ReLU (VPU, f32)

    # Masked global average pool: mask zeroes pad anchors and carries 1/(H*W).
    hm = h * mask_ref[...]                               # (32, 768)
    # Per-batch segments start at lane-aligned offsets (384 = 3*128).
    pooled = jnp.concatenate(
        [jnp.sum(hm[:, b * HWP:(b + 1) * HWP], axis=1, keepdims=True)
         for b in range(B)],
        axis=1)                                          # (F, B)

    # fc head Linear(n_features, 1) on the VPU/XLU (too small for the MXU).
    y = jnp.sum(pooled * wf_ref[...], axis=0, keepdims=True) + bf_ref[0]   # (1, B)
    out_ref[...] = y.astype(out_ref.dtype)


# ---------------- wrapper -------------------------------------------------------
@jax.jit
def model_forward(x_nchw, conv_w, conv_b, fc_w, fc_b):
    """x_nchw: (B, C_IN, H, W) float32 -> (B, 1) float32."""
    Bx, C, Hx, Wx = x_nchw.shape
    assert (Bx, C, Hx, Wx) == (B, C_IN, H, W)

    # --- tiny layout glue (no 9x im2col expansion here; that happens in-kernel) ---
    xp = jnp.pad(x_nchw, ((0, 0), (0, 0), (1, 1), (1, 1)))          # (B, C, 18, 18)
    xf = xp.reshape(Bx, C_IN, HP * WP)                              # (B, C, 324)
    xf = jnp.pad(xf, ((0, 0), (0, 0), (0, HWP - HP * WP)))          # (B, C, 384)
    xw = jnp.transpose(xf, (1, 0, 2)).reshape(C_IN, Bx * HWP)       # (C, 768)
    xw = jnp.pad(xw, ((0, C_PAD - C_IN), (0, WIDE_IN - Bx * HWP)))  # (8, 896)
    xw = xw.astype(jnp.float32)

    # conv weight (F, C, KH, KW) -> (F, KH, KW, Cpad) -> (F, 72), tap-major ordering
    wc = jnp.transpose(conv_w, (0, 2, 3, 1))                        # (F, 3, 3, C)
    wc = jnp.pad(wc, ((0, 0), (0, 0), (0, 0), (0, C_PAD - C_IN)))   # (F, 3, 3, 8)
    wc = wc.reshape(N_FEATURES, K_PAD).astype(jnp.float32)          # (32, 72)

    bc = conv_b.reshape(N_FEATURES, 1).astype(jnp.float32)          # (32, 1)
    wf = fc_w.reshape(N_FEATURES, 1).astype(jnp.float32)            # (32, 1)
    bf = fc_b.reshape(1).astype(jnp.float32)                        # (1,) -> SMEM

    # valid-anchor mask per batch segment, folded with 1/(H*W)
    p = jnp.arange(HWP)
    valid = ((p // WP) < H) & ((p % WP) < W)
    mask_seg = jnp.where(valid, 1.0 / (H * W), 0.0).astype(jnp.float32)
    mask = jnp.tile(mask_seg, (Bx,)).reshape(1, Bx * HWP)           # (1, 768)

    out = pl.pallas_call(
        _fused_model_kernel,
        out_shape=jax.ShapeDtypeStruct((1, Bx), jnp.float32),
        grid=(1,),
        in_specs=[
            pl.BlockSpec((C_PAD, WIDE_IN), lambda i: (0, 0)),
            pl.BlockSpec((N_FEATURES, K_PAD), lambda i: (0, 0)),
            pl.BlockSpec((N_FEATURES, 1), lambda i: (0, 0)),
            pl.BlockSpec((N_FEATURES, 1), lambda i: (0, 0)),
            pl.BlockSpec((1, WIDE), lambda i: (0, 0)),
            pl.BlockSpec(memory_space=pltpu.MemorySpace.SMEM),
        ],
        out_specs=pl.BlockSpec((1, Bx), lambda i: (0, 0)),
        compiler_params=pltpu.CompilerParams(
            dimension_semantics=("arbitrary",)),
    )(xw, wc, bc, wf, mask, bf)
    return out.reshape(Bx, 1)


def _reference(x_nchw, conv_w, conv_b, fc_w, fc_b):
    """Pure-JAX f32 reference of the same surrogate forward (sanity check)."""
    h = jax.lax.conv_general_dilated(
        x_nchw, conv_w, window_strides=(1, 1), padding="SAME",
        dimension_numbers=("NCHW", "OIHW", "NCHW"))
    h = jnp.maximum(h + conv_b[None, :, None, None], 0.0)   # (B, F, H, W)
    pooled = jnp.mean(h, axis=(2, 3))                        # (B, F)
    return pooled @ fc_w.T + fc_b                            # (B, 1)


if __name__ == "__main__":
    key = jax.random.PRNGKey(0)
    kx, kw1, kb1, kw2, kb2 = jax.random.split(key, 5)

    x = jax.random.normal(kx, (B, C_IN, H, W), dtype=jnp.float32)
    conv_w = jax.random.normal(kw1, (N_FEATURES, C_IN, KH, KW), jnp.float32) * 0.1
    conv_b = jax.random.normal(kb1, (N_FEATURES,), jnp.float32) * 0.01
    fc_w = jax.random.normal(kw2, (1, N_FEATURES), jnp.float32) * 0.1
    fc_b = jax.random.normal(kb2, (1,), jnp.float32) * 0.01

    out = jax.block_until_ready(model_forward(x, conv_w, conv_b, fc_w, fc_b))
    ref = jax.block_until_ready(_reference(x, conv_w, conv_b, fc_w, fc_b))

    assert out.shape == (B, 1)
    # bf16 MXU operands (f32 accumulation) -> slightly loosened tolerance vs f32 ref.
    assert jnp.allclose(out, ref, atol=1e-2, rtol=1e-2)

    print("KERNEL_OK")
</pallas_src>

<mosaic_0001>
module attributes {stable_mosaic.version = 11 : i64} {
  func.func @_fused_model_kernel(%arg0: i32, %arg1: memref<8x896xf32, #tpu.memory_space<vmem>>, %arg2: memref<32x72xf32, #tpu.memory_space<vmem>>, %arg3: memref<32x1xf32, #tpu.memory_space<vmem>>, %arg4: memref<32x1xf32, #tpu.memory_space<vmem>>, %arg5: memref<1x768xf32, #tpu.memory_space<vmem>>, %arg6: memref<1xf32, #tpu.memory_space<smem>>, %arg7: memref<1x2xf32, #tpu.memory_space<vmem>>) attributes {dimension_semantics = [#tpu.dimension_semantics<arbitrary>], iteration_bounds = array<i64: 1>, scalar_prefetch = 0 : i64, scratch_operands = 0 : i64, tpu.core_type = #tpu.core_type<tc>, window_params = [{pipeline_mode = #tpu.pipeline_mode<synchronous>, transform_indices = @transform_0, window_bounds = array<i64: 8, 896>}, {pipeline_mode = #tpu.pipeline_mode<synchronous>, transform_indices = @transform_1, window_bounds = array<i64: 32, 72>}, {pipeline_mode = #tpu.pipeline_mode<synchronous>, transform_indices = @transform_2, window_bounds = array<i64: 32, 1>}, {pipeline_mode = #tpu.pipeline_mode<synchronous>, transform_indices = @transform_3, window_bounds = array<i64: 32, 1>}, {pipeline_mode = #tpu.pipeline_mode<synchronous>, transform_indices = @transform_4, window_bounds = array<i64: 1, 768>}, {transform_indices = @transform_5, window_bounds = array<i64: 1>}, {pipeline_mode = #tpu.pipeline_mode<synchronous>, transform_indices = @transform_6, window_bounds = array<i64: 1, 2>}]} {
    %c0 = arith.constant 0 : index
    %c0_0 = arith.constant 0 : index
    %0 = vector.load %arg1[%c0, %c0_0] : memref<8x896xf32, #tpu.memory_space<vmem>>, vector<8x896xf32>
    %1 = vector.extract_strided_slice %0 {offsets = [0, 0], sizes = [8, 768], strides = [1, 1]} : vector<8x896xf32> to vector<8x768xf32>
    %2 = vector.extract_strided_slice %0 {offsets = [0, 1], sizes = [8, 768], strides = [1, 1]} : vector<8x896xf32> to vector<8x768xf32>
    %3 = vector.extract_strided_slice %0 {offsets = [0, 2], sizes = [8, 768], strides = [1, 1]} : vector<8x896xf32> to vector<8x768xf32>
    %4 = vector.extract_strided_slice %0 {offsets = [0, 18], sizes = [8, 768], strides = [1, 1]} : vector<8x896xf32> to vector<8x768xf32>
    %5 = vector.extract_strided_slice %0 {offsets = [0, 19], sizes = [8, 768], strides = [1, 1]} : vector<8x896xf32> to vector<8x768xf32>
    %6 = vector.extract_strided_slice %0 {offsets = [0, 20], sizes = [8, 768], strides = [1, 1]} : vector<8x896xf32> to vector<8x768xf32>
    %7 = vector.extract_strided_slice %0 {offsets = [0, 36], sizes = [8, 768], strides = [1, 1]} : vector<8x896xf32> to vector<8x768xf32>
    %8 = vector.extract_strided_slice %0 {offsets = [0, 37], sizes = [8, 768], strides = [1, 1]} : vector<8x896xf32> to vector<8x768xf32>
    %9 = vector.extract_strided_slice %0 {offsets = [0, 38], sizes = [8, 768], strides = [1, 1]} : vector<8x896xf32> to vector<8x768xf32>
    %10 = tpu.concatenate %1, %2, %3, %4, %5, %6, %7, %8, %9 in 0 : vector<8x768xf32>, vector<8x768xf32>, vector<8x768xf32>, vector<8x768xf32>, vector<8x768xf32>, vector<8x768xf32>, vector<8x768xf32>, vector<8x768xf32>, vector<8x768xf32> -> vector<72x768xf32>
    %c0_1 = arith.constant 0 : index
    %c0_2 = arith.constant 0 : index
    %11 = vector.load %arg2[%c0_1, %c0_2] : memref<32x72xf32, #tpu.memory_space<vmem>>, vector<32x72xf32>
    %12 = arith.truncf %11 : vector<32x72xf32> to vector<32x72xbf16>
    %13 = arith.truncf %10 : vector<72x768xf32> to vector<72x768xbf16>
    %cst = arith.constant dense<0.000000e+00> : vector<32x768xf32>
    %14 = tpu.matmul %12, %13, %cst {dimension_numbers = #tpu.dot_dimension_numbers<[1], [0], [0], [1], [0, 0, 1, 1], [], []>} : vector<32x72xbf16>, vector<72x768xbf16>, vector<32x768xf32> -> vector<32x768xf32>
    %c0_3 = arith.constant 0 : index
    %c0_4 = arith.constant 0 : index
    %15 = vector.load %arg3[%c0_3, %c0_4] : memref<32x1xf32, #tpu.memory_space<vmem>>, vector<32x1xf32>
    %16 = vector.broadcast %15 : vector<32x1xf32> to vector<32x768xf32>
    %17 = arith.addf %14, %16 : vector<32x768xf32>
    %cst_5 = arith.constant 0.000000e+00 : f32
    %18 = vector.broadcast %cst_5 : f32 to vector<32x768xf32>
    %19 = arith.maximumf %17, %18 : vector<32x768xf32>
    %c0_6 = arith.constant 0 : index
    %c0_7 = arith.constant 0 : index
    %20 = vector.load %arg5[%c0_6, %c0_7] : memref<1x768xf32, #tpu.memory_space<vmem>>, vector<1x768xf32>
    %21 = vector.broadcast %20 : vector<1x768xf32> to vector<32x768xf32>
    %22 = arith.mulf %19, %21 : vector<32x768xf32>
    %23 = vector.extract_strided_slice %22 {offsets = [0, 0], sizes = [32, 384], strides = [1, 1]} : vector<32x768xf32> to vector<32x384xf32>
    %cst_8 = arith.constant dense<0.000000e+00> : vector<32xf32>
    %24 = vector.multi_reduction <add>, %23, %cst_8 [1] : vector<32x384xf32> to vector<32xf32>
    %25 = vector.shape_cast %24 : vector<32xf32> to vector<32x1xf32>
    %26 = vector.extract_strided_slice %22 {offsets = [0, 384], sizes = [32, 384], strides = [1, 1]} : vector<32x768xf32> to vector<32x384xf32>
    %cst_9 = arith.constant dense<0.000000e+00> : vector<32xf32>
    %27 = vector.multi_reduction <add>, %26, %cst_9 [1] : vector<32x384xf32> to vector<32xf32>
    %28 = vector.shape_cast %27 : vector<32xf32> to vector<32x1xf32>
    %29 = tpu.concatenate %25, %28 in 1 : vector<32x1xf32>, vector<32x1xf32> -> vector<32x2xf32>
    %c0_10 = arith.constant 0 : index
    %c0_11 = arith.constant 0 : index
    %30 = vector.load %arg4[%c0_10, %c0_11] : memref<32x1xf32, #tpu.memory_space<vmem>>, vector<32x1xf32>
    %31 = vector.broadcast %30 : vector<32x1xf32> to vector<32x2xf32>
    %32 = arith.mulf %29, %31 : vector<32x2xf32>
    %cst_12 = arith.constant dense<0.000000e+00> : vector<2xf32>
    %33 = vector.multi_reduction <add>, %32, %cst_12 [0] : vector<32x2xf32> to vector<2xf32>
    %34 = vector.shape_cast %33 : vector<2xf32> to vector<1x2xf32>
    %c0_13 = arith.constant 0 : index
    %35 = memref.load %arg6[%c0_13] : memref<1xf32, #tpu.memory_space<smem>>
    %36 = vector.broadcast %35 : f32 to vector<1x2xf32>
    %37 = arith.addf %34, %36 : vector<1x2xf32>
    %c0_14 = arith.constant 0 : index
    %c0_15 = arith.constant 0 : index
    %38 = vector.load %arg7[%c0_14, %c0_15] : memref<1x2xf32, #tpu.memory_space<vmem>>, vector<1x2xf32>
    tpu.vector_store %arg7[%c0_14, %c0_15], %37 {strides = array<i32>} : memref<1x2xf32, #tpu.memory_space<vmem>>, vector<1x2xf32>,
    return
  }
  func.func @transform_0(%arg0: i32) -> (i32, i32) {
    %c0_i32 = arith.constant 0 : i32
    %c0_i32_0 = arith.constant 0 : i32
    %c0_i32_1 = arith.constant 0 : i32
    return %c0_i32, %c0_i32_0 : i32, i32
  }
  func.func @transform_1(%arg0: i32) -> (i32, i32) {
    %c0_i32 = arith.constant 0 : i32
    %c0_i32_0 = arith.constant 0 : i32
    %c0_i32_1 = arith.constant 0 : i32
    return %c0_i32, %c0_i32_0 : i32, i32
  }
  func.func @transform_2(%arg0: i32) -> (i32, i32) {
    %c0_i32 = arith.constant 0 : i32
    %c0_i32_0 = arith.constant 0 : i32
    %c0_i32_1 = arith.constant 0 : i32
    return %c0_i32, %c0_i32_0 : i32, i32
  }
  func.func @transform_3(%arg0: i32) -> (i32, i32) {
    %c0_i32 = arith.constant 0 : i32
    %c0_i32_0 = arith.constant 0 : i32
    %c0_i32_1 = arith.constant 0 : i32
    return %c0_i32, %c0_i32_0 : i32, i32
  }
  func.func @transform_4(%arg0: i32) -> (i32, i32) {
    %c0_i32 = arith.constant 0 : i32
    %c0_i32_0 = arith.constant 0 : i32
    %c0_i32_1 = arith.constant 0 : i32
    return %c0_i32, %c0_i32_0 : i32, i32
  }
  func.func @transform_5(%arg0: i32) -> i32 {
    %c0_i32 = arith.constant 0 : i32
    %c0_i32_0 = arith.constant 0 : i32
    return %c0_i32 : i32
  }
  func.func @transform_6(%arg0: i32) -> (i32, i32) {
    %c0_i32 = arith.constant 0 : i32
    %c0_i32_0 = arith.constant 0 : i32
    %c0_i32_1 = arith.constant 0 : i32
    return %c0_i32, %c0_i32_0 : i32, i32
  }
}

</mosaic_0001>

<llo_original>
// kernel: model_forward.1
$region0: #{model_forward.1}
  #allocation0 [shape = 'u32[]', space=smem, size = 0x4, offset = 0x4, fixed_abs, tag = 'smem constant byte address 0x4 - core index']
  #allocation1 [shape = 'u32[144,128]{1,0:T(1,128)}', space=vmem, size = 0x12000, scoped, tag = 'internal scratch']
  #allocation2 [shape = 'f32[1]{0:T(128)S(6)}', space=smem, size = 0x200, scoped, tag = 'scoped memory for model_forward.1']
  %s0 = inlined_call_operand.vmem [shape: f32[8,896], index: 0, kind: input, shape index: {}]
  %s1 = inlined_call_operand.vmem [shape: f32[32,72], index: 1, kind: input, shape index: {}]
  %s2 = inlined_call_operand.vmem [shape: f32[32,1], index: 2, kind: input, shape index: {}]
  %s3 = inlined_call_operand.vmem [shape: f32[32,1], index: 3, kind: input, shape index: {}]
  %s4 = inlined_call_operand.vmem [shape: f32[1,768], index: 4, kind: input, shape index: {}]
  %s5 = inlined_call_operand.<no memory space> [shape: f32[1], index: 5, kind: input, shape index: {}]
  %s6 = inlined_call_operand.hbm [shape: f32[1,2], index: 6, kind: output, shape index: {}]
  %s7 = sld [smem:[#allocation0]]
  $region34: #{model_forward.1} parent=0
    _
  %s9 = ssub.s32 1, %s7
  %s10 = scalar_select 0, %s9, %s7
  %11 = sst [smem:[#allocation2]] %s5
  $region1: #{model_forward.1} parent=0
    #allocation3 [shape = 'u8[512]{0}', space=vmem, size = 0x400, scoped, tag = 'output window, operand 0, single buffered']
    #allocation4 [shape = 's32[1]{0}', space=sflag, size = 0x4, scoped, tag = 'scoped memory for model_forward.1']
    %12 = vsyncpa [#allocation4], 0
    // Predicated region
    $region2: #{model_forward.1} parent=1 // pred_check
      _
    $region3: #{model_forward.1} parent=1 // pred_check_branch
      %14 = sbr.rel (0) target = $region5
    $region4: #{model_forward.1} parent=1 // pred_region
      _
    $region5: #{model_forward.1} parent=1 // pred_fallthru
      _
    // Predicated region
    $region6: #{model_forward.1} parent=1 // pred_check
      _
    $region7: #{model_forward.1} parent=1 // pred_check_branch
      %16 = sbr.rel (0) target = $region9
    $region8: #{model_forward.1} parent=1 // pred_region
      _
    $region9: #{model_forward.1} parent=1 // pred_fallthru
      _
    // Predicated region
    $region10: #{model_forward.1} parent=1 // pred_check
      _
    $region11: #{model_forward.1} parent=1 // pred_check_branch
      %18 = sbr.rel (0) target = $region13
    $region12: #{model_forward.1} parent=1 // pred_region
      _
    $region13: #{model_forward.1} parent=1 // pred_fallthru
      _
    // Predicated region
    $region14: #{model_forward.1} parent=1 // pred_check
      _
    $region15: #{model_forward.1} parent=1 // pred_check_branch
      %20 = sbr.rel (0) target = $region17
    $region16: #{model_forward.1} parent=1 // pred_region
      _
    $region17: #{model_forward.1} parent=1 // pred_fallthru
      _
    // Predicated region
    $region18: #{model_forward.1} parent=1 // pred_check
      _
    $region19: #{model_forward.1} parent=1 // pred_check_branch
      %22 = sbr.rel (0) target = $region21
    $region20: #{model_forward.1} parent=1 // pred_region
      _
    $region21: #{model_forward.1} parent=1 // pred_fallthru
      _
    // Predicated region
    $region22: #{model_forward.1} parent=1 // pred_check
      _
    $region23: #{model_forward.1} parent=1 // pred_check_branch
      %24 = sbr.rel (0) target = $region25
    $region24: #{model_forward.1} parent=1 // pred_region
      _
    $region25: #{model_forward.1} parent=1 // pred_fallthru
      _
    %v26 = vld [vmem:[%s0] sm:$0xff]
    %v27 = vld [vmem:[%s0 + $0x8] sm:$0xff]
    %v28 = vld [vmem:[%s0 + $0x10] sm:$0xff]
    %v29 = vld [vmem:[%s0 + $0x18] sm:$0xff]
    %v30 = vld [vmem:[%s0 + $0x20] sm:$0xff]
    %v31 = vld [vmem:[%s0 + $0x28] sm:$0xff]
    %v32 = vld [vmem:[%s0 + $0x30] sm:$0xff]
    %40 = vrot.lane.b32.xlu0 %v26, 127
    %v41 = vpop.permute.xlu0 %40
    %42 = vrot.lane.b32.xlu0 %v27, 127
    %v43 = vpop.permute.xlu0 %42
    %44 = vrot.lane.b32.xlu0 %v28, 127
    %v45 = vpop.permute.xlu0 %44
    %46 = vrot.lane.b32.xlu0 %v29, 127
    %v47 = vpop.permute.xlu0 %46
    %48 = vrot.lane.b32.xlu0 %v30, 127
    %v49 = vpop.permute.xlu0 %48
    %50 = vrot.lane.b32.xlu0 %v31, 127
    %v51 = vpop.permute.xlu0 %50
    %52 = vrot.lane.b32.xlu0 %v32, 127
    %v53 = vpop.permute.xlu0 %52
    %vm54 = vcmask 1039360
    %v55 = vsel %vm54, %v41, %v43
    %v56 = vsel %vm54, %v43, %v45
    %v57 = vsel %vm54, %v45, %v47
    %v58 = vsel %vm54, %v47, %v49
    %v59 = vsel %vm54, %v49, %v51
    %v60 = vsel %vm54, %v51, %v53
    %67 = vrot.lane.b32.xlu0 %v26, 126
    %v68 = vpop.permute.xlu0 %67
    %69 = vrot.lane.b32.xlu0 %v27, 126
    %v70 = vpop.permute.xlu0 %69
    %71 = vrot.lane.b32.xlu0 %v28, 126
    %v72 = vpop.permute.xlu0 %71
    %73 = vrot.lane.b32.xlu0 %v29, 126
    %v74 = vpop.permute.xlu0 %73
    %75 = vrot.lane.b32.xlu0 %v30, 126
    %v76 = vpop.permute.xlu0 %75
    %77 = vrot.lane.b32.xlu0 %v31, 126
    %v78 = vpop.permute.xlu0 %77
    %79 = vrot.lane.b32.xlu0 %v32, 126
    %v80 = vpop.permute.xlu0 %79
    %vm81 = vcmask 1031168
    %v82 = vsel %vm81, %v68, %v70
    %v83 = vsel %vm81, %v70, %v72
    %v84 = vsel %vm81, %v72, %v74
    %v85 = vsel %vm81, %v74, %v76
    %v86 = vsel %vm81, %v76, %v78
    %v87 = vsel %vm81, %v78, %v80
    %94 = vrot.lane.b32.xlu0 %v26, 110
    %v95 = vpop.permute.xlu0 %94
    %96 = vrot.lane.b32.xlu0 %v27, 110
    %v97 = vpop.permute.xlu0 %96
    %98 = vrot.lane.b32.xlu0 %v28, 110
    %v99 = vpop.permute.xlu0 %98
    %100 = vrot.lane.b32.xlu0 %v29, 110
    %v101 = vpop.permute.xlu0 %100
    %102 = vrot.lane.b32.xlu0 %v30, 110
    %v103 = vpop.permute.xlu0 %102
    %104 = vrot.lane.b32.xlu0 %v31, 110
    %v105 = vpop.permute.xlu0 %104
    %106 = vrot.lane.b32.xlu0 %v32, 110
    %v107 = vpop.permute.xlu0 %106
    %vm108 = vcmask 900096
    %v109 = vsel %vm108, %v95, %v97
    %v110 = vsel %vm108, %v97, %v99
    %v111 = vsel %vm108, %v99, %v101
    %v112 = vsel %vm108, %v101, %v103
    %v113 = vsel %vm108, %v103, %v105
    %v114 = vsel %vm108, %v105, %v107
    %121 = vrot.lane.b32.xlu0 %v26, 109
    %v122 = vpop.permute.xlu0 %121
    %123 = vrot.lane.b32.xlu0 %v27, 109
    %v124 = vpop.permute.xlu0 %123
    %125 = vrot.lane.b32.xlu0 %v28, 109
    %v126 = vpop.permute.xlu0 %125
    %127 = vrot.lane.b32.xlu0 %v29, 109
    %v128 = vpop.permute.xlu0 %127
    %129 = vrot.lane.b32.xlu0 %v30, 109
    %v130 = vpop.permute.xlu0 %129
    %131 = vrot.lane.b32.xlu0 %v31, 109
    %v132 = vpop.permute.xlu0 %131
    %133 = vrot.lane.b32.xlu0 %v32, 109
    %v134 = vpop.permute.xlu0 %133
    %vm135 = vcmask 891904
    %v136 = vsel %vm135, %v122, %v124
    %v137 = vsel %vm135, %v124, %v126
    %v138 = vsel %vm135, %v126, %v128
    %v139 = vsel %vm135, %v128, %v130
    %v140 = vsel %vm135, %v130, %v132
    %v141 = vsel %vm135, %v132, %v134
    %148 = vrot.lane.b32.xlu0 %v26, 108
    %v149 = vpop.permute.xlu0 %148
    %150 = vrot.lane.b32.xlu0 %v27, 108
    %v151 = vpop.permute.xlu0 %150
    %152 = vrot.lane.b32.xlu0 %v28, 108
    %v153 = vpop.permute.xlu0 %152
    %154 = vrot.lane.b32.xlu0 %v29, 108
    %v155 = vpop.permute.xlu0 %154
    %156 = vrot.lane.b32.xlu0 %v30, 108
    %v157 = vpop.permute.xlu0 %156
    %158 = vrot.lane.b32.xlu0 %v31, 108
    %v159 = vpop.permute.xlu0 %158
    %160 = vrot.lane.b32.xlu0 %v32, 108
    %v161 = vpop.permute.xlu0 %160
    %vm162 = vcmask 883712
    %v163 = vsel %vm162, %v149, %v151
    %v164 = vsel %vm162, %v151, %v153
    %v165 = vsel %vm162, %v153, %v155
    %v166 = vsel %vm162, %v155, %v157
    %v167 = vsel %vm162, %v157, %v159
    %v168 = vsel %vm162, %v159, %v161
    %175 = vrot.lane.b32.xlu0 %v26, 92
    %v176 = vpop.permute.xlu0 %175
    %177 = vrot.lane.b32.xlu0 %v27, 92
    %v178 = vpop.permute.xlu0 %177
    %179 = vrot.lane.b32.xlu0 %v28, 92
    %v180 = vpop.permute.xlu0 %179
    %181 = vrot.lane.b32.xlu0 %v29, 92
    %v182 = vpop.permute.xlu0 %181
    %183 = vrot.lane.b32.xlu0 %v30, 92
    %v184 = vpop.permute.xlu0 %183
    %185 = vrot.lane.b32.xlu0 %v31, 92
    %v186 = vpop.permute.xlu0 %185
    %187 = vrot.lane.b32.xlu0 %v32, 92
    %v188 = vpop.permute.xlu0 %187
    %vm189 = vcmask 752640
    %v190 = vsel %vm189, %v176, %v178
    %v191 = vsel %vm189, %v178, %v180
    %v192 = vsel %vm189, %v180, %v182
    %v193 = vsel %vm189, %v182, %v184
    %v194 = vsel %vm189, %v184, %v186
    %v195 = vsel %vm189, %v186, %v188
    %202 = vrot.lane.b32.xlu0 %v26, 91
    %v203 = vpop.permute.xlu0 %202
    %204 = vrot.lane.b32.xlu0 %v27, 91
    %v205 = vpop.permute.xlu0 %204
    %206 = vrot.lane.b32.xlu0 %v28, 91
    %v207 = vpop.permute.xlu0 %206
    %208 = vrot.lane.b32.xlu0 %v29, 91
    %v209 = vpop.permute.xlu0 %208
    %210 = vrot.lane.b32.xlu0 %v30, 91
    %v211 = vpop.permute.xlu0 %210
    %212 = vrot.lane.b32.xlu0 %v31, 91
    %v213 = vpop.permute.xlu0 %212
    %214 = vrot.lane.b32.xlu0 %v32, 91
    %v215 = vpop.permute.xlu0 %214
    %vm216 = vcmask 744448
    %v217 = vsel %vm216, %v203, %v205
    %v218 = vsel %vm216, %v205, %v207
    %v219 = vsel %vm216, %v207, %v209
    %v220 = vsel %vm216, %v209, %v211
    %v221 = vsel %vm216, %v211, %v213
    %v222 = vsel %vm216, %v213, %v215
    %229 = vrot.lane.b32.xlu0 %v26, 90
    %v230 = vpop.permute.xlu0 %229
    %231 = vrot.lane.b32.xlu0 %v27, 90
    %v232 = vpop.permute.xlu0 %231
    %233 = vrot.lane.b32.xlu0 %v28, 90
    %v234 = vpop.permute.xlu0 %233
    %235 = vrot.lane.b32.xlu0 %v29, 90
    %v236 = vpop.permute.xlu0 %235
    %237 = vrot.lane.b32.xlu0 %v30, 90
    %v238 = vpop.permute.xlu0 %237
    %239 = vrot.lane.b32.xlu0 %v31, 90
    %v240 = vpop.permute.xlu0 %239
    %241 = vrot.lane.b32.xlu0 %v32, 90
    %v242 = vpop.permute.xlu0 %241
    %vm243 = vcmask 736256
    %v244 = vsel %vm243, %v230, %v232
    %v245 = vsel %vm243, %v232, %v234
    %v246 = vsel %vm243, %v234, %v236
    %v247 = vsel %vm243, %v236, %v238
    %v248 = vsel %vm243, %v238, %v240
    %v249 = vsel %vm243, %v240, %v242
    %v256 = vld [vmem:[%s1] sm:$0xff]
    %v257 = vld [vmem:[%s1 + $0x8] sm:$0xff]
    %v258 = vld [vmem:[%s1 + $0x10] sm:$0xff]
    %v259 = vld [vmem:[%s1 + $0x18] sm:$0xff]
    %v260 = vpack.c.bf16 %v257, %v256
    %v261 = vpack.c.bf16 %v259, %v258
    %v262 = vpack.c.bf16 %v55, %v26
    %v263 = vpack.c.bf16 %v56, %v27
    %v264 = vpack.c.bf16 %v57, %v28
    %v265 = vpack.c.bf16 %v58, %v29
    %v266 = vpack.c.bf16 %v59, %v30
    %v267 = vpack.c.bf16 %v60, %v31
    %v268 = vpack.c.bf16 %v109, %v82
    %v269 = vpack.c.bf16 %v110, %v83
    %v270 = vpack.c.bf16 %v111, %v84
    %v271 = vpack.c.bf16 %v112, %v85
    %v272 = vpack.c.bf16 %v113, %v86
    %v273 = vpack.c.bf16 %v114, %v87
    %v274 = vpack.c.bf16 %v163, %v136
    %v275 = vpack.c.bf16 %v164, %v137
    %v276 = vpack.c.bf16 %v165, %v138
    %v277 = vpack.c.bf16 %v166, %v139
    %v278 = vpack.c.bf16 %v167, %v140
    %v279 = vpack.c.bf16 %v168, %v141
    %v280 = vpack.c.bf16 %v217, %v190
    %v281 = vpack.c.bf16 %v218, %v191
    %v282 = vpack.c.bf16 %v219, %v192
    %v283 = vpack.c.bf16 %v220, %v193
    %v284 = vpack.c.bf16 %v221, %v194
    %v285 = vpack.c.bf16 %v222, %v195
    %v286 = vpack.c.bf16 %v244, %v244
    %v287 = vpack.c.bf16 %v245, %v245
    %v288 = vpack.c.bf16 %v246, %v246
    %v289 = vpack.c.bf16 %v247, %v247
    %v290 = vpack.c.bf16 %v248, %v248
    %v291 = vpack.c.bf16 %v249, %v249
    %v292 = vld [vmem:[%s2] sm:$0xff]
    %v293 = vld [vmem:[%s2 + $0x8] sm:$0xff]
    %v294 = vld [vmem:[%s2 + $0x10] sm:$0xff]
    %v295 = vld [vmem:[%s2 + $0x18] sm:$0xff]
    %297 = vset.pattern.permute.xlu0 0
    %298 = vperm.xlu0 %297, %v292
    %v299 = vpop.permute.xlu0 %298
    %302 = vset.pattern.permute.xlu0 0
    %303 = vperm.xlu0 %302, %v293
    %v304 = vpop.permute.xlu0 %303
    %307 = vset.pattern.permute.xlu0 0
    %308 = vperm.xlu0 %307, %v294
    %v309 = vpop.permute.xlu0 %308
    %312 = vset.pattern.permute.xlu0 0
    %313 = vperm.xlu0 %312, %v295
    %v314 = vpop.permute.xlu0 %313
    %vm316 = vcmask 588800
    %v318 = vsel %vm316, %v260, 0
    %v321 = vsel %vm316, %v261, 0
    %vm323 = vcmask 1043456
    %v325 = vsel %vm323, %v286, 0
    %v328 = vsel %vm323, %v287, 0
    %v331 = vsel %vm323, %v288, 0
    %v334 = vsel %vm323, %v289, 0
    %v337 = vsel %vm323, %v290, 0
    %v340 = vsel %vm323, %v291, 0
    %342 = vmatprep.subr.bf16.mxu0 %v263
    %343 = vmatpush1.bf16.msra.mxu0 %v262
    %344 = vmatprep.subr.bf16.mxu0 %v269
    %345 = vmatpush1.bf16.msra.mxu0 %v268
    %346 = vmatprep.subr.bf16.mxu0 %v275
    %347 = vmatpush1.bf16.msra.mxu0 %v274
    %348 = vmatprep.subr.bf16.mxu0 %v281
    %349 = vmatpush1.bf16.msra.mxu0 %v280
    %350 = vmatprep.subr.bf16.mxu0 %v328
    %351 = vmatpush1.bf16.msra.mxu0 %v325
    %352 = vmatprep.subr.bf16.mxu0 0
    %353 = vmatpush1.bf16.msra.mxu0 0
    %354 = vmatprep.subr.bf16.mxu0 0
    %355 = vmatpush1.bf16.msra.mxu0 0
    %356 = vmatprep.subr.bf16.mxu0 0
    %357 = vmatpush1.bf16.msra.mxu0 0
    %358 = vmatprep.subr.bf16.mxu0 0
    %359 = vmatpush1.bf16.msra.mxu0 0
    %360 = vmatprep.subr.bf16.mxu0 0
    %361 = vmatpush1.bf16.msra.mxu0 0
    %362 = vmatprep.subr.bf16.mxu0 0
    %363 = vmatpush1.bf16.msra.mxu0 0
    %364 = vmatprep.subr.bf16.mxu0 0
    %365 = vmatpush1.bf16.msra.mxu0 0
    %366 = vmatprep.subr.bf16.mxu0 0
    %367 = vmatpush1.bf16.msra.mxu0 0
    %368 = vmatprep.subr.bf16.mxu0 0
    %369 = vmatpush1.bf16.msra.mxu0 0
    %370 = vmatprep.subr.bf16.mxu0 0
    %371 = vmatpush1.bf16.msra.mxu0 0
    %372 = vmatprep.subr.bf16.mxu0 0
    %373 = vmatpush1.bf16.msra.mxu0 0
    %374 = vmatprep.mubr.bf16.mxu0 0
    %375 = vmatmul.mubr.bf16.gmra.mrb[0].mxu0 %v318
    %v376 = vpop.f32.mrb[0].mxu0
    %v377 = vadd.f32 %v299, %v376
    %v378 = vpop.f32.mrb[0].mxu0
    %v379 = vadd.f32 %v299, %v378
    %v380 = vpop.f32.mrb[0].mxu0
    %v381 = vadd.f32 %v304, %v380
    %v382 = vpop.f32.mrb[0].mxu0
    %v383 = vadd.f32 %v304, %v382
    %384 = vmatprep.mubr.bf16.mxu0 0
    %385 = vmatmul.mubr.bf16.gmra.mrb[0].mxu0 %v321
    %v386 = vpop.f32.mrb[0].mxu0
    %v387 = vadd.f32 %v309, %v386
    %v388 = vpop.f32.mrb[0].mxu0
    %v389 = vadd.f32 %v309, %v388
    %v390 = vpop.f32.mrb[0].mxu0
    %v391 = vadd.f32 %v314, %v390
    %v392 = vpop.f32.mrb[0].mxu0
    %v393 = vadd.f32 %v314, %v392
    %394 = vdwg.mxu0
    %395 = vmatprep.subr.bf16.mxu0 %v265
    %396 = vmatpush1.bf16.msra.mxu0 %v264
    %397 = vmatprep.subr.bf16.mxu0 %v271
    %398 = vmatpush1.bf16.msra.mxu0 %v270
    %399 = vmatprep.subr.bf16.mxu0 %v277
    %400 = vmatpush1.bf16.msra.mxu0 %v276
    %401 = vmatprep.subr.bf16.mxu0 %v283
    %402 = vmatpush1.bf16.msra.mxu0 %v282
    %403 = vmatprep.subr.bf16.mxu0 %v334
    %404 = vmatpush1.bf16.msra.mxu0 %v331
    %405 = vmatprep.subr.bf16.mxu0 0
    %406 = vmatpush1.bf16.msra.mxu0 0
    %407 = vmatprep.subr.bf16.mxu0 0
    %408 = vmatpush1.bf16.msra.mxu0 0
    %409 = vmatprep.subr.bf16.mxu0 0
    %410 = vmatpush1.bf16.msra.mxu0 0
    %411 = vmatprep.subr.bf16.mxu0 0
    %412 = vmatpush1.bf16.msra.mxu0 0
    %413 = vmatprep.subr.bf16.mxu0 0
    %414 = vmatpush1.bf16.msra.mxu0 0
    %415 = vmatprep.subr.bf16.mxu0 0
    %416 = vmatpush1.bf16.msra.mxu0 0
    %417 = vmatprep.subr.bf16.mxu0 0
    %418 = vmatpush1.bf16.msra.mxu0 0
    %419 = vmatprep.subr.bf16.mxu0 0
    %420 = vmatpush1.bf16.msra.mxu0 0
    %421 = vmatprep.subr.bf16.mxu0 0
    %422 = vmatpush1.bf16.msra.mxu0 0
    %423 = vmatprep.subr.bf16.mxu0 0
    %424 = vmatpush1.bf16.msra.mxu0 0
    %425 = vmatprep.subr.bf16.mxu0 0
    %426 = vmatpush1.bf16.msra.mxu0 0
    %427 = vmatprep.mubr.bf16.mxu0 0
    %428 = vmatmul.mubr.bf16.gmra.mrb[0].mxu0 %v318
    %v429 = vpop.f32.mrb[0].mxu0
    %v430 = vadd.f32 %v299, %v429
    %v431 = vpop.f32.mrb[0].mxu0
    %v432 = vadd.f32 %v299, %v431
    %v433 = vpop.f32.mrb[0].mxu0
    %v434 = vadd.f32 %v304, %v433
    %v435 = vpop.f32.mrb[0].mxu0
    %v436 = vadd.f32 %v304, %v435
    %437 = vmatprep.mubr.bf16.mxu0 0
    %438 = vmatmul.mubr.bf16.gmra.mrb[0].mxu0 %v321
    %v439 = vpop.f32.mrb[0].mxu0
    %v440 = vadd.f32 %v309, %v439
    %v441 = vpop.f32.mrb[0].mxu0
    %v442 = vadd.f32 %v309, %v441
    %v443 = vpop.f32.mrb[0].mxu0
    %v444 = vadd.f32 %v314, %v443
    %v445 = vpop.f32.mrb[0].mxu0
    %v446 = vadd.f32 %v314, %v445
    %447 = vdwg.mxu0
    %448 = vmatprep.subr.bf16.mxu0 %v267
    %449 = vmatpush1.bf16.msra.mxu0 %v266
    %450 = vmatprep.subr.bf16.mxu0 %v273
    %451 = vmatpush1.bf16.msra.mxu0 %v272
    %452 = vmatprep.subr.bf16.mxu0 %v279
    %453 = vmatpush1.bf16.msra.mxu0 %v278
    %454 = vmatprep.subr.bf16.mxu0 %v285
    %455 = vmatpush1.bf16.msra.mxu0 %v284
    %456 = vmatprep.subr.bf16.mxu0 %v340
    %457 = vmatpush1.bf16.msra.mxu0 %v337
    %458 = vmatprep.subr.bf16.mxu0 0
    %459 = vmatpush1.bf16.msra.mxu0 0
    %460 = vmatprep.subr.bf16.mxu0 0
    %461 = vmatpush1.bf16.msra.mxu0 0
    %462 = vmatprep.subr.bf16.mxu0 0
    %463 = vmatpush1.bf16.msra.mxu0 0
    %464 = vmatprep.subr.bf16.mxu0 0
    %465 = vmatpush1.bf16.msra.mxu0 0
    %466 = vmatprep.subr.bf16.mxu0 0
    %467 = vmatpush1.bf16.msra.mxu0 0
    %468 = vmatprep.subr.bf16.mxu0 0
    %469 = vmatpush1.bf16.msra.mxu0 0
    %470 = vmatprep.subr.bf16.mxu0 0
    %471 = vmatpush1.bf16.msra.mxu0 0
    %472 = vmatprep.subr.bf16.mxu0 0
    %473 = vmatpush1.bf16.msra.mxu0 0
    %474 = vmatprep.subr.bf16.mxu0 0
    %475 = vmatpush1.bf16.msra.mxu0 0
    %476 = vmatprep.subr.bf16.mxu0 0
    %477 = vmatpush1.bf16.msra.mxu0 0
    %478 = vmatprep.subr.bf16.mxu0 0
    %479 = vmatpush1.bf16.msra.mxu0 0
    %480 = vmatprep.mubr.bf16.mxu0 0
    %481 = vmatmul.mubr.bf16.gmra.mrb[0].mxu0 %v318
    %v482 = vpop.f32.mrb[0].mxu0
    %v483 = vadd.f32 %v299, %v482
    %v484 = vpop.f32.mrb[0].mxu0
    %v485 = vadd.f32 %v299, %v484
    %v486 = vpop.f32.mrb[0].mxu0
    %v487 = vadd.f32 %v304, %v486
    %v488 = vpop.f32.mrb[0].mxu0
    %v489 = vadd.f32 %v304, %v488
    %490 = vmatprep.mubr.bf16.mxu0 0
    %491 = vmatmul.mubr.bf16.gmra.mrb[0].mxu0 %v321
    %v492 = vpop.f32.mrb[0].mxu0
    %v493 = vadd.f32 %v309, %v492
    %v494 = vpop.f32.mrb[0].mxu0
    %v495 = vadd.f32 %v309, %v494
    %v496 = vpop.f32.mrb[0].mxu0
    %v497 = vadd.f32 %v314, %v496
    %v498 = vpop.f32.mrb[0].mxu0
    %v499 = vadd.f32 %v314, %v498
    %500 = vdwg.mxu0
    %v501 = vmax.f32 %v377, 0.0
    %v502 = vmax.f32 %v379, 0.0
    %v503 = vmax.f32 %v430, 0.0
    %v504 = vmax.f32 %v432, 0.0
    %v505 = vmax.f32 %v483, 0.0
    %v506 = vmax.f32 %v485, 0.0
    %v507 = vmax.f32 %v381, 0.0
    %v508 = vmax.f32 %v383, 0.0
    %v509 = vmax.f32 %v434, 0.0
    %v510 = vmax.f32 %v436, 0.0
    %v511 = vmax.f32 %v487, 0.0
    %v512 = vmax.f32 %v489, 0.0
    %v513 = vmax.f32 %v387, 0.0
    %v514 = vmax.f32 %v389, 0.0
    %v515 = vmax.f32 %v440, 0.0
    %v516 = vmax.f32 %v442, 0.0
    %v517 = vmax.f32 %v493, 0.0
    %v518 = vmax.f32 %v495, 0.0
    %v519 = vmax.f32 %v391, 0.0
    %v520 = vmax.f32 %v393, 0.0
    %v521 = vmax.f32 %v444, 0.0
    %v522 = vmax.f32 %v446, 0.0
    %v523 = vmax.f32 %v497, 0.0
    %v524 = vmax.f32 %v499, 0.0
    %v525 = vld [vmem:[%s4] sm:$0x3f]
    %v527 = vlaneseq
    %v528 = vshrl.u32 %v527, 7
    %v529 = vsub.s32 0, %v528
    %v530 = vrot.slane %v525, %v529
    %v531 = vlaneseq
    %v532 = vshrl.u32 %v531, 7
    %v533 = vsub.s32 1, %v532
    %v534 = vrot.slane %v525, %v533
    %v535 = vlaneseq
    %v536 = vshrl.u32 %v535, 7
    %v537 = vsub.s32 2, %v536
    %v538 = vrot.slane %v525, %v537
    %v539 = vlaneseq
    %v540 = vshrl.u32 %v539, 7
    %v541 = vsub.s32 3, %v540
    %v542 = vrot.slane %v525, %v541
    %v543 = vlaneseq
    %v544 = vshrl.u32 %v543, 7
    %v545 = vsub.s32 4, %v544
    %v546 = vrot.slane %v525, %v545
    %v547 = vlaneseq
    %v548 = vshrl.u32 %v547, 7
    %v549 = vsub.s32 5, %v548
    %v550 = vrot.slane %v525, %v549
    %v557 = vmul.f32 %v501, %v530
    %v558 = vmul.f32 %v502, %v534
    %v559 = vmul.f32 %v503, %v538
    %v560 = vmul.f32 %v504, %v542
    %v561 = vmul.f32 %v505, %v546
    %v562 = vmul.f32 %v506, %v550
    %v563 = vmul.f32 %v507, %v530
    %v564 = vmul.f32 %v508, %v534
    %v565 = vmul.f32 %v509, %v538
    %v566 = vmul.f32 %v510, %v542
    %v567 = vmul.f32 %v511, %v546
    %v568 = vmul.f32 %v512, %v550
    %v569 = vmul.f32 %v513, %v530
    %v570 = vmul.f32 %v514, %v534
    %v571 = vmul.f32 %v515, %v538
    %v572 = vmul.f32 %v516, %v542
    %v573 = vmul.f32 %v517, %v546
    %v574 = vmul.f32 %v518, %v550
    %v575 = vmul.f32 %v519, %v530
    %v576 = vmul.f32 %v520, %v534
    %v577 = vmul.f32 %v521, %v538
    %v578 = vmul.f32 %v522, %v542
    %v579 = vmul.f32 %v523, %v546
    %v580 = vmul.f32 %v524, %v550
    %v581 = vadd.f32 %v557, %v558
    %v582 = vadd.f32 %v581, %v559
    %583 = vadd.xlane.f32.xlu0 %v582
    %v584 = vpop.xlane.xlu0 %583
    %v585 = vadd.f32 %v563, %v564
    %v586 = vadd.f32 %v585, %v565
    %587 = vadd.xlane.f32.xlu0 %v586
    %v588 = vpop.xlane.xlu0 %587
    %v589 = vadd.f32 %v569, %v570
    %v590 = vadd.f32 %v589, %v571
    %591 = vadd.xlane.f32.xlu0 %v590
    %v592 = vpop.xlane.xlu0 %591
    %v593 = vadd.f32 %v575, %v576
    %v594 = vadd.f32 %v593, %v577
    %595 = vadd.xlane.f32.xlu0 %v594
    %v596 = vpop.xlane.xlu0 %595
    %v597 = vadd.f32 %v560, %v561
    %v598 = vadd.f32 %v597, %v562
    %599 = vadd.xlane.f32.xlu0 %v598
    %v600 = vpop.xlane.xlu0 %599
    %v601 = vadd.f32 %v566, %v567
    %v602 = vadd.f32 %v601, %v568
    %603 = vadd.xlane.f32.xlu0 %v602
    %v604 = vpop.xlane.xlu0 %603
    %v605 = vadd.f32 %v572, %v573
    %v606 = vadd.f32 %v605, %v574
    %607 = vadd.xlane.f32.xlu0 %v606
    %v608 = vpop.xlane.xlu0 %607
    %v609 = vadd.f32 %v578, %v579
    %v610 = vadd.f32 %v609, %v580
    %611 = vadd.xlane.f32.xlu0 %v610
    %v612 = vpop.xlane.xlu0 %611
    %vm613 = vcmask 7168
    %v614 = vsel %vm613, %v584, %v600
    %v615 = vsel %vm613, %v588, %v604
    %v616 = vsel %vm613, %v592, %v608
    %v617 = vsel %vm613, %v596, %v612
    %v618 = vld [vmem:[%s3] sm:$0xff]
    %v619 = vld [vmem:[%s3 + $0x8] sm:$0xff]
    %v620 = vld [vmem:[%s3 + $0x10] sm:$0xff]
    %v621 = vld [vmem:[%s3 + $0x18] sm:$0xff]
    %623 = vset.pattern.permute.xlu0 0
    %624 = vperm.xlu0 %623, %v618
    %v625 = vpop.permute.xlu0 %624
    %628 = vset.pattern.permute.xlu0 0
    %629 = vperm.xlu0 %628, %v619
    %v630 = vpop.permute.xlu0 %629
    %633 = vset.pattern.permute.xlu0 0
    %634 = vperm.xlu0 %633, %v620
    %v635 = vpop.permute.xlu0 %634
    %638 = vset.pattern.permute.xlu0 0
    %639 = vperm.xlu0 %638, %v621
    %v640 = vpop.permute.xlu0 %639
    %v642 = vmul.f32 %v614, %v625
    %v643 = vmul.f32 %v615, %v630
    %v644 = vmul.f32 %v616, %v635
    %v645 = vmul.f32 %v617, %v640
    %vm646 = vcmask 15360
    %v647 = vsel %vm646, %v642, 0.0
    %v648 = vsel %vm646, %v643, 0.0
    %v649 = vadd.f32 %v647, %v648
    %v650 = vsel %vm646, %v644, 0.0
    %v651 = vadd.f32 %v649, %v650
    %v652 = vsel %vm646, %v645, 0.0
    %v653 = vadd.f32 %v651, %v652
    %v654 = vrot.slane %v653, 4
    %v655 = vadd.f32 %v653, %v654
    %v656 = vrot.slane %v655, 2
    %v657 = vadd.f32 %v655, %v656
    %v658 = vrot.slane %v657, 1
    %v659 = vadd.f32 %v657, %v658
    %s660 = sld [smem:[#allocation2]]
    %v661 = vstv %s660
    %v662 = vadd.f32 %v659, %v661
    %vm663 = vcmask 8192
    %664 = vst.msk [vmem:[#allocation3] sm:$0x1] %vm663, %v662
    // Predicated region
    $region26: #{model_forward.1} parent=1 // pred_check
      _
    $region27: #{model_forward.1} parent=1 // pred_check_branch
      %666 = sbr.rel (0) target = $region29
    $region28: #{model_forward.1} parent=1 // pred_region
      %s668 = ssub.s32 16, 16
      %669 = vsyncadd [#allocation4], %s668
      %s671 = sshll.u32 [#allocation3], 4
      %s672 = int_to_ptr.vmem [resolvable:$true] %s671
      %674 = dma.vmem_to_hbm [thread:$0]  %s672, 16, %s6, [#allocation4]
    $region29: #{model_forward.1} parent=1 // pred_fallthru
      _
    // Predicated region
    $region30: #{model_forward.1} parent=1 // pred_check
      _
    $region31: #{model_forward.1} parent=1 // pred_check_branch
      %676 = sbr.rel (0) target = $region33
    $region32: #{model_forward.1} parent=1 // pred_region
      %677 = dma.done [#allocation4], 16
    $region33: #{model_forward.1} parent=1 // pred_fallthru
      _
    %678 = vsyncpa [#allocation4], 1

</llo_original>
